<compile_context>
chip_gen: v5e
topology: v5e:2x2
jax: 0.10.0
libtpu: 0.0.40
codegen_flags: <defaults>
</compile_context>

<pallas_src>
import math

import jax
import jax.numpy as jnp
from jax.experimental import pallas as pl
from jax.experimental.pallas import tpu as pltpu

# ---- static problem configuration (small shapes consistent with the module) ----
B = 2                         # batch
L = 8                         # input_length (power of two)
F = 32                        # n_features
O = 8                         # output_length
NB = 1                        # n_blocks
NLOG = int(math.log2(L))      # number of (2,1)-stride convs per WaveLayer
EPS = 1e-5                    # nn.InstanceNorm1d default eps
PRELU_ALPHA = 0.25            # nn.PReLU default init
DENOM = math.sqrt(F)          # attention denominator
INV_DENOM = 1.0 / DENOM


def waveformer_kernel(x_ref, coefqk_ref, biasqk_ref,
                      ffw_ref, ffb_ref, gamma_ref, beta_ref,
                      prew_ref, preb_ref, alpha_ref, finw_ref, finb_ref,
                      out_ref):
    x = x_ref[0]                                                       # (L, F) f32
    col0 = jax.lax.broadcasted_iota(jnp.int32, (L, F), 1) == 0
    ocol0 = jax.lax.broadcasted_iota(jnp.int32, (1, O), 1) == 0

    # mean over L of feature column 0 (torch: mean(x[:, :, :, 0], -1, True))
    mean0 = jnp.sum(jnp.where(col0, x, 0.0)) * jnp.float32(1.0 / L)
    x = x - jnp.where(col0, mean0, 0.0)

    def inst_norm(z, gamma, beta):
        # Decoupled statistics: sum(z) and sum(z*z) are independent, so the
        # two XLU sublane reduces can dual-issue; per-element work collapses
        # to z*scale + shift with (1, F) precomputed rows.
        s1 = jnp.sum(z, axis=0, keepdims=True)                         # (1, F)
        s2 = jnp.sum(z * z, axis=0, keepdims=True)                     # (1, F)
        mu = s1 * jnp.float32(1.0 / L)
        var = jnp.maximum(s2 * jnp.float32(1.0 / L) - mu * mu, 0.0)    # biased var
        scale = gamma * jax.lax.rsqrt(var + jnp.float32(EPS))
        shift = beta - mu * scale
        return z * scale + shift

    for blk in range(NB):                                  # WaveBlock chain (static unroll)
        # Fused q/k WaveLayer: the Conv2d(1,1,(2,1),stride=(2,1)) chain is a
        # fixed linear reduction over L; both coefficient rows go through one
        # (2,L)x(L,F) MXU dot instead of two broadcast-multiply + reduce pairs.
        qk = jax.lax.dot_general(
            coefqk_ref[blk], x, (((1,), (0,)), ((), ())),
            preferred_element_type=jnp.float32) + biasqk_ref[blk]      # (2, F)
        q = qk[0:1]                                                     # (1, F)
        k = qk[1:2]                                                     # (1, F)

        # outer product q^T @ k on the MXU (no XLU transpose / VALU broadcast-mul)
        logits = jax.lax.dot_general(
            q, k, (((0,), (0,)), ((), ())),
            preferred_element_type=jnp.float32) * jnp.float32(INV_DENOM)  # (F, F)

        m = jnp.max(logits, axis=-1, keepdims=True)
        e = jnp.exp(logits - m)
        att = e * pl.reciprocal(jnp.sum(e, axis=-1, keepdims=True), approx=True)

        gamma = gamma_ref[blk]                                          # (1, F)
        beta = beta_ref[blk]                                            # (1, F)
        x = x + jnp.dot(x, att, preferred_element_type=jnp.float32)
        x = inst_norm(x, gamma, beta)
        x = x + (jnp.dot(x, ffw_ref[blk], preferred_element_type=jnp.float32)
                 + ffb_ref[blk])
        x = inst_norm(x, gamma, beta)

    # prefinal Linear(F, 1) and final Linear(L, O) both on the MXU
    v = jnp.dot(x, prew_ref[...], preferred_element_type=jnp.float32) + preb_ref[...]  # (L, 1)
    v = jnp.where(v >= 0.0, v, alpha_ref[...] * v)                                     # PReLU
    out = jax.lax.dot_general(
        v, finw_ref[...], (((0,), (0,)), ((), ())),
        preferred_element_type=jnp.float32) + finb_ref[...]                            # (1, O)
    out = out + jnp.where(ocol0, mean0, 0.0)                 # add the series mean back
    out_ref[...] = out.reshape(1, 1, O)                      # lane-dense full-row store


def wave_coeffs(w, b):
    """Expand the Conv2d(1,1,(2,1),stride=(2,1)) chain algebraically.

    w: (NB, NLOG, 2), b: (NB, NLOG)  ->  coef: (NB, L), bias: (NB,)
    result[f] = sum_l coef[l] * x[l, f] + bias  (x-independent, so hoisted here).
    """
    l_idx = jnp.arange(L)
    coef = jnp.ones((NB, L), jnp.float32)
    bias = jnp.zeros((NB,), jnp.float32)
    for i in range(NLOG):
        bit = (l_idx >> i) & 1
        coef = coef * jnp.where(bit[None, :] == 0, w[:, i, 0:1], w[:, i, 1:2])
        bias = (w[:, i, 0] + w[:, i, 1]) * bias + b[:, i]
    return coef, bias


def waveformer_pallas(x4, p):
    """x4: (B, 1, L, F) float32  ->  (B, 1, 1, O) float32."""
    x3 = x4[:, 0]                                            # (B, L, F) — glue reshape
    coef_q, bias_q = wave_coeffs(p["qw"], p["qb"])
    coef_k, bias_k = wave_coeffs(p["kw"], p["kb"])
    coef_qk = jnp.stack([coef_q, coef_k], axis=1)            # (NB, 2, L)
    bias_qk = jnp.stack([bias_q, bias_k], axis=1)[..., None] # (NB, 2, 1)
    preb = p["pre_b"].reshape(1, 1).astype(jnp.float32)      # (1, 1)
    alpha = jnp.full((1, 1), PRELU_ALPHA, jnp.float32)       # PReLU parameter

    grid_spec = pltpu.PrefetchScalarGridSpec(
        num_scalar_prefetch=0,
        grid=(B,),                                           # one batch row per step
        in_specs=[
            pl.BlockSpec((1, L, F), lambda b: (b, 0, 0)),    # x      (batch-sliced)
            pl.BlockSpec((NB, 2, L), lambda b: (0, 0, 0)),   # coef_qk (grid-invariant)
            pl.BlockSpec((NB, 2, 1), lambda b: (0, 0, 0)),   # bias_qk
            pl.BlockSpec((NB, F, F), lambda b: (0, 0, 0)),   # ff weight (in, out)
            pl.BlockSpec((NB, 1, F), lambda b: (0, 0, 0)),   # ff bias
            pl.BlockSpec((NB, 1, F), lambda b: (0, 0, 0)),   # instnorm gamma
            pl.BlockSpec((NB, 1, F), lambda b: (0, 0, 0)),   # instnorm beta
            pl.BlockSpec((F, 1), lambda b: (0, 0)),          # prefinal weight
            pl.BlockSpec((1, 1), lambda b: (0, 0)),          # prefinal bias
            pl.BlockSpec((1, 1), lambda b: (0, 0)),          # PReLU alpha
            pl.BlockSpec((L, O), lambda b: (0, 0)),          # final weight (in, out)
            pl.BlockSpec((1, O), lambda b: (0, 0)),          # final bias
        ],
        out_specs=pl.BlockSpec((1, 1, O), lambda b: (b, 0, 0)),
    )

    out = pl.pallas_call(
        waveformer_kernel,
        out_shape=jax.ShapeDtypeStruct((B, 1, O), jnp.float32),
        grid_spec=grid_spec,
        # "parallel" lets v7x shard the batch grid across its 2 TensorCores;
        # on v5e/v6e (1 TC) it is a no-op beyond ~0.35 us/step pipeline cost.
        compiler_params=pltpu.CompilerParams(dimension_semantics=("parallel",)),
    )(x3, coef_qk, bias_qk, p["ffw"], p["ffb"], p["gamma"], p["beta"],
      p["prew"], preb, alpha, p["finw"], p["finb"])
    return out.reshape(B, 1, 1, O)


# ---------------- deterministic synthetic parameters ----------------
def make_params(key):
    ks = jax.random.split(key, 12)
    return {
        "qw":    0.3 * jax.random.normal(ks[0], (NB, NLOG, 2), jnp.float32),
        "qb":    0.1 * jax.random.normal(ks[1], (NB, NLOG), jnp.float32),
        "kw":    0.3 * jax.random.normal(ks[2], (NB, NLOG, 2), jnp.float32),
        "kb":    0.1 * jax.random.normal(ks[3], (NB, NLOG), jnp.float32),
        "ffw":   0.2 * jax.random.normal(ks[4], (NB, F, F), jnp.float32),   # stored as (in, out)
        "ffb":   0.1 * jax.random.normal(ks[5], (NB, 1, F), jnp.float32),
        "gamma": 1.0 + 0.1 * jax.random.normal(ks[6], (NB, 1, F), jnp.float32),
        "beta":  0.1 * jax.random.normal(ks[7], (NB, 1, F), jnp.float32),
        "prew":  0.2 * jax.random.normal(ks[8], (F, 1), jnp.float32),       # (in, out=1)
        "pre_b": 0.1 * jax.random.normal(ks[9], (), jnp.float32),
        "finw":  0.2 * jax.random.normal(ks[10], (L, O), jnp.float32),      # stored as (in, out)
        "finb":  0.1 * jax.random.normal(ks[11], (1, O), jnp.float32),
    }


# ---------------- pure-JAX reference (mirrors the torch forward) ----------------
def waveformer_ref(x4, p):
    hi = jax.lax.Precision.HIGHEST
    mean0 = jnp.mean(x4[:, :, :, 0], axis=-1, keepdims=True)        # (B, 1, 1)
    x4 = x4.at[:, :, :, 0].add(-mean0)
    for blk in range(NB):
        q = x4
        k = x4
        for i in range(NLOG):
            q = p["qw"][blk, i, 0] * q[:, :, 0::2, :] + p["qw"][blk, i, 1] * q[:, :, 1::2, :] + p["qb"][blk, i]
            k = p["kw"][blk, i, 0] * k[:, :, 0::2, :] + p["kw"][blk, i, 1] * k[:, :, 1::2, :] + p["kb"][blk, i]
        logits = jnp.matmul(jnp.swapaxes(q, -1, -2), k, precision=hi) / DENOM
        att = jax.nn.softmax(logits, axis=-1)
        x4 = x4 + jnp.matmul(x4, att, precision=hi)
        gamma = p["gamma"][blk, 0]
        beta = p["beta"][blk, 0]

        def inorm(z):
            mu = jnp.mean(z, axis=2, keepdims=True)
            var = jnp.mean((z - mu) ** 2, axis=2, keepdims=True)
            return (z - mu) / jnp.sqrt(var + EPS) * gamma + beta

        x4 = inorm(x4)
        x4 = x4 + (jnp.matmul(x4, p["ffw"][blk], precision=hi) + p["ffb"][blk, 0])
        x4 = inorm(x4)
    v = jnp.einsum("bclf,f->bcl", x4, p["prew"][:, 0], precision=hi) + p["pre_b"]
    v = v.reshape(-1, 1, 1, L)
    v = jnp.where(v >= 0, v, PRELU_ALPHA * v)
    y = jnp.matmul(v, p["finw"], precision=hi) + p["finb"][0]
    y = y.at[:, :, :, 0].add(mean0)
    return y


if __name__ == "__main__":
    key = jax.random.PRNGKey(0)
    kx, kp = jax.random.split(key)
    x = jax.random.normal(kx, (B, 1, L, F), jnp.float32)
    params = make_params(kp)

    out = jax.block_until_ready(waveformer_pallas(x, params))
    ref = jax.block_until_ready(waveformer_ref(x, params))

    assert out.shape == (B, 1, 1, O), out.shape
    assert bool(jnp.all(jnp.isfinite(out)))
    assert bool(jnp.allclose(out, ref, rtol=2e-2, atol=2e-2)), (out, ref)
    print("KERNEL_OK")
</pallas_src>

<mosaic_0001>
module attributes {stable_mosaic.version = 11 : i64} {
  func.func @waveformer_kernel(%arg0: i32, %arg1: memref<1x8x32xf32, #tpu.memory_space<vmem>>, %arg2: memref<1x2x8xf32, #tpu.memory_space<vmem>>, %arg3: memref<1x2x1xf32, #tpu.memory_space<vmem>>, %arg4: memref<1x32x32xf32, #tpu.memory_space<vmem>>, %arg5: memref<1x1x32xf32, #tpu.memory_space<vmem>>, %arg6: memref<1x1x32xf32, #tpu.memory_space<vmem>>, %arg7: memref<1x1x32xf32, #tpu.memory_space<vmem>>, %arg8: memref<32x1xf32, #tpu.memory_space<vmem>>, %arg9: memref<1x1xf32, #tpu.memory_space<vmem>>, %arg10: memref<1x1xf32, #tpu.memory_space<vmem>>, %arg11: memref<8x8xf32, #tpu.memory_space<vmem>>, %arg12: memref<1x8xf32, #tpu.memory_space<vmem>>, %arg13: memref<1x1x8xf32, #tpu.memory_space<vmem>>) attributes {dimension_semantics = [#tpu.dimension_semantics<parallel>], iteration_bounds = array<i64: 2>, scalar_prefetch = 0 : i64, scratch_operands = 0 : i64, tpu.core_type = #tpu.core_type<tc>, window_params = [{transform_indices = @transform_0, window_bounds = array<i64: 1, 8, 32>}, {pipeline_mode = #tpu.pipeline_mode<synchronous>, transform_indices = @transform_1, window_bounds = array<i64: 1, 2, 8>}, {pipeline_mode = #tpu.pipeline_mode<synchronous>, transform_indices = @transform_2, window_bounds = array<i64: 1, 2, 1>}, {pipeline_mode = #tpu.pipeline_mode<synchronous>, transform_indices = @transform_3, window_bounds = array<i64: 1, 32, 32>}, {pipeline_mode = #tpu.pipeline_mode<synchronous>, transform_indices = @transform_4, window_bounds = array<i64: 1, 1, 32>}, {pipeline_mode = #tpu.pipeline_mode<synchronous>, transform_indices = @transform_5, window_bounds = array<i64: 1, 1, 32>}, {pipeline_mode = #tpu.pipeline_mode<synchronous>, transform_indices = @transform_6, window_bounds = array<i64: 1, 1, 32>}, {pipeline_mode = #tpu.pipeline_mode<synchronous>, transform_indices = @transform_7, window_bounds = array<i64: 32, 1>}, {pipeline_mode = #tpu.pipeline_mode<synchronous>, transform_indices = @transform_8, window_bounds = array<i64: 1, 1>}, {pipeline_mode = #tpu.pipeline_mode<synchronous>, transform_indices = @transform_9, window_bounds = array<i64: 1, 1>}, {pipeline_mode = #tpu.pipeline_mode<synchronous>, transform_indices = @transform_10, window_bounds = array<i64: 8, 8>}, {pipeline_mode = #tpu.pipeline_mode<synchronous>, transform_indices = @transform_11, window_bounds = array<i64: 1, 8>}, {transform_indices = @transform_12, window_bounds = array<i64: 1, 1, 8>}]} {
    %c0 = arith.constant 0 : index
    %c0_0 = arith.constant 0 : index
    %c0_1 = arith.constant 0 : index
    %0 = vector.load %arg1[%c0, %c0_0, %c0_1] : memref<1x8x32xf32, #tpu.memory_space<vmem>>, vector<1x8x32xf32>
    %1 = vector.shape_cast %0 : vector<1x8x32xf32> to vector<8x32xf32>
    %2 = tpu.iota {dimensions = array<i32: 1>} : vector<8x32xi32>
    %c0_i32 = arith.constant 0 : i32
    %3 = vector.broadcast %c0_i32 : i32 to vector<8x32xi32>
    %4 = arith.cmpi eq, %2, %3 : vector<8x32xi32>
    %5 = tpu.iota {dimensions = array<i32: 1>} : vector<1x8xi32>
    %c0_i32_2 = arith.constant 0 : i32
    %6 = vector.broadcast %c0_i32_2 : i32 to vector<1x8xi32>
    %7 = arith.cmpi eq, %5, %6 : vector<1x8xi32>
    %cst = arith.constant 0.000000e+00 : f32
    %8 = vector.broadcast %cst : f32 to vector<8x32xf32>
    %9 = arith.select %4, %1, %8 : vector<8x32xi1>, vector<8x32xf32>
    %10 = vector.shape_cast %9 : vector<8x32xf32> to vector<1x8x32xf32>
    %cst_3 = arith.constant dense<0.000000e+00> : vector<1xf32>
    %11 = vector.multi_reduction <add>, %10, %cst_3 [1, 2] : vector<1x8x32xf32> to vector<1xf32>
    %12 = vector.shape_cast %11 : vector<1xf32> to vector<1x1x1xf32>
    %13 = vector.extract %12[0, 0, 0] : f32 from vector<1x1x1xf32>
    %cst_4 = arith.constant 1.250000e-01 : f32
    %14 = arith.mulf %13, %cst_4 : f32
    %cst_5 = arith.constant 0.000000e+00 : f32
    %15 = vector.broadcast %14 : f32 to vector<8x32xf32>
    %16 = vector.broadcast %cst_5 : f32 to vector<8x32xf32>
    %17 = arith.select %4, %15, %16 : vector<8x32xi1>, vector<8x32xf32>
    %18 = arith.subf %1, %17 : vector<8x32xf32>
    %c0_6 = arith.constant 0 : index
    %c0_7 = arith.constant 0 : index
    %c0_8 = arith.constant 0 : index
    %19 = vector.load %arg2[%c0_6, %c0_7, %c0_8] : memref<1x2x8xf32, #tpu.memory_space<vmem>>, vector<1x2x8xf32>
    %20 = vector.shape_cast %19 : vector<1x2x8xf32> to vector<2x8xf32>
    %cst_9 = arith.constant dense<0.000000e+00> : vector<2x32xf32>
    %21 = tpu.matmul %20, %18, %cst_9 {dimension_numbers = #tpu.dot_dimension_numbers<[1], [0], [0], [1], [0, 0, 1, 1], [], []>} : vector<2x8xf32>, vector<8x32xf32>, vector<2x32xf32> -> vector<2x32xf32>
    %c0_10 = arith.constant 0 : index
    %c0_11 = arith.constant 0 : index
    %c0_12 = arith.constant 0 : index
    %22 = vector.load %arg3[%c0_10, %c0_11, %c0_12] : memref<1x2x1xf32, #tpu.memory_space<vmem>>, vector<1x2x1xf32>
    %23 = vector.shape_cast %22 : vector<1x2x1xf32> to vector<2x1xf32>
    %24 = vector.broadcast %23 : vector<2x1xf32> to vector<2x32xf32>
    %25 = arith.addf %21, %24 : vector<2x32xf32>
    %26 = vector.extract_strided_slice %25 {offsets = [0, 0], sizes = [1, 32], strides = [1, 1]} : vector<2x32xf32> to vector<1x32xf32>
    %27 = vector.extract_strided_slice %25 {offsets = [1, 0], sizes = [1, 32], strides = [1, 1]} : vector<2x32xf32> to vector<1x32xf32>
    %cst_13 = arith.constant dense<0.000000e+00> : vector<32x32xf32>
    %28 = tpu.matmul %26, %27, %cst_13 {dimension_numbers = #tpu.dot_dimension_numbers<[0], [0], [1], [1], [0, 1, 1, 1], [], []>} : vector<1x32xf32>, vector<1x32xf32>, vector<32x32xf32> -> vector<32x32xf32>
    %cst_14 = arith.constant 0.176776692 : f32
    %29 = vector.broadcast %cst_14 : f32 to vector<32x32xf32>
    %30 = arith.mulf %28, %29 : vector<32x32xf32>
    %cst_15 = arith.constant dense<0xFF800000> : vector<32xf32>
    %31 = vector.multi_reduction <maximumf>, %30, %cst_15 [1] : vector<32x32xf32> to vector<32xf32>
    %32 = vector.shape_cast %31 : vector<32xf32> to vector<32x1xf32>
    %33 = vector.broadcast %32 : vector<32x1xf32> to vector<32x32xf32>
    %34 = arith.subf %30, %33 : vector<32x32xf32>
    %35 = math.exp %34 : vector<32x32xf32>
    %cst_16 = arith.constant dense<0.000000e+00> : vector<32xf32>
    %36 = vector.multi_reduction <add>, %35, %cst_16 [1] : vector<32x32xf32> to vector<32xf32>
    %37 = vector.shape_cast %36 : vector<32xf32> to vector<32x1xf32>
    %38 = tpu.reciprocal %37 {approx = true} : vector<32x1xf32> -> vector<32x1xf32>
    %39 = vector.broadcast %38 : vector<32x1xf32> to vector<32x32xf32>
    %40 = arith.mulf %35, %39 : vector<32x32xf32>
    %c0_17 = arith.constant 0 : index
    %c0_18 = arith.constant 0 : index
    %c0_19 = arith.constant 0 : index
    %41 = vector.load %arg6[%c0_17, %c0_18, %c0_19] : memref<1x1x32xf32, #tpu.memory_space<vmem>>, vector<1x1x32xf32>
    %42 = vector.shape_cast %41 : vector<1x1x32xf32> to vector<1x32xf32>
    %c0_20 = arith.constant 0 : index
    %c0_21 = arith.constant 0 : index
    %c0_22 = arith.constant 0 : index
    %43 = vector.load %arg7[%c0_20, %c0_21, %c0_22] : memref<1x1x32xf32, #tpu.memory_space<vmem>>, vector<1x1x32xf32>
    %44 = vector.shape_cast %43 : vector<1x1x32xf32> to vector<1x32xf32>
    %cst_23 = arith.constant dense<0.000000e+00> : vector<8x32xf32>
    %45 = tpu.matmul %18, %40, %cst_23 {dimension_numbers = #tpu.dot_dimension_numbers<[1], [0], [0], [1], [0, 0, 1, 1], [], []>} : vector<8x32xf32>, vector<32x32xf32>, vector<8x32xf32> -> vector<8x32xf32>
    %46 = arith.addf %18, %45 : vector<8x32xf32>
    %cst_24 = arith.constant dense<0.000000e+00> : vector<32xf32>
    %47 = vector.multi_reduction <add>, %46, %cst_24 [0] : vector<8x32xf32> to vector<32xf32>
    %48 = vector.shape_cast %47 : vector<32xf32> to vector<1x32xf32>
    %49 = arith.mulf %46, %46 : vector<8x32xf32>
    %cst_25 = arith.constant dense<0.000000e+00> : vector<32xf32>
    %50 = vector.multi_reduction <add>, %49, %cst_25 [0] : vector<8x32xf32> to vector<32xf32>
    %51 = vector.shape_cast %50 : vector<32xf32> to vector<1x32xf32>
    %cst_26 = arith.constant 1.250000e-01 : f32
    %52 = vector.broadcast %cst_26 : f32 to vector<1x32xf32>
    %53 = arith.mulf %48, %52 : vector<1x32xf32>
    %cst_27 = arith.constant 1.250000e-01 : f32
    %54 = vector.broadcast %cst_27 : f32 to vector<1x32xf32>
    %55 = arith.mulf %51, %54 : vector<1x32xf32>
    %56 = arith.mulf %53, %53 : vector<1x32xf32>
    %57 = arith.subf %55, %56 : vector<1x32xf32>
    %cst_28 = arith.constant 0.000000e+00 : f32
    %58 = vector.broadcast %cst_28 : f32 to vector<1x32xf32>
    %59 = arith.maximumf %57, %58 : vector<1x32xf32>
    %cst_29 = arith.constant 9.99999974E-6 : f32
    %60 = vector.broadcast %cst_29 : f32 to vector<1x32xf32>
    %61 = arith.addf %59, %60 : vector<1x32xf32>
    %62 = math.rsqrt %61 : vector<1x32xf32>
    %63 = arith.mulf %42, %62 : vector<1x32xf32>
    %64 = arith.mulf %53, %63 : vector<1x32xf32>
    %65 = arith.subf %44, %64 : vector<1x32xf32>
    %66 = vector.broadcast %63 : vector<1x32xf32> to vector<8x32xf32>
    %67 = arith.mulf %46, %66 : vector<8x32xf32>
    %68 = vector.broadcast %65 : vector<1x32xf32> to vector<8x32xf32>
    %69 = arith.addf %67, %68 : vector<8x32xf32>
    %c0_30 = arith.constant 0 : index
    %c0_31 = arith.constant 0 : index
    %c0_32 = arith.constant 0 : index
    %70 = vector.load %arg4[%c0_30, %c0_31, %c0_32] : memref<1x32x32xf32, #tpu.memory_space<vmem>>, vector<1x32x32xf32>
    %71 = vector.shape_cast %70 : vector<1x32x32xf32> to vector<32x32xf32>
    %cst_33 = arith.constant dense<0.000000e+00> : vector<8x32xf32>
    %72 = tpu.matmul %69, %71, %cst_33 {dimension_numbers = #tpu.dot_dimension_numbers<[1], [0], [0], [1], [0, 0, 1, 1], [], []>} : vector<8x32xf32>, vector<32x32xf32>, vector<8x32xf32> -> vector<8x32xf32>
    %c0_34 = arith.constant 0 : index
    %c0_35 = arith.constant 0 : index
    %c0_36 = arith.constant 0 : index
    %73 = vector.load %arg5[%c0_34, %c0_35, %c0_36] : memref<1x1x32xf32, #tpu.memory_space<vmem>>, vector<1x1x32xf32>
    %74 = vector.shape_cast %73 : vector<1x1x32xf32> to vector<1x32xf32>
    %75 = vector.broadcast %74 : vector<1x32xf32> to vector<8x32xf32>
    %76 = arith.addf %72, %75 : vector<8x32xf32>
    %77 = arith.addf %69, %76 : vector<8x32xf32>
    %cst_37 = arith.constant dense<0.000000e+00> : vector<32xf32>
    %78 = vector.multi_reduction <add>, %77, %cst_37 [0] : vector<8x32xf32> to vector<32xf32>
    %79 = vector.shape_cast %78 : vector<32xf32> to vector<1x32xf32>
    %80 = arith.mulf %77, %77 : vector<8x32xf32>
    %cst_38 = arith.constant dense<0.000000e+00> : vector<32xf32>
    %81 = vector.multi_reduction <add>, %80, %cst_38 [0] : vector<8x32xf32> to vector<32xf32>
    %82 = vector.shape_cast %81 : vector<32xf32> to vector<1x32xf32>
    %cst_39 = arith.constant 1.250000e-01 : f32
    %83 = vector.broadcast %cst_39 : f32 to vector<1x32xf32>
    %84 = arith.mulf %79, %83 : vector<1x32xf32>
    %cst_40 = arith.constant 1.250000e-01 : f32
    %85 = vector.broadcast %cst_40 : f32 to vector<1x32xf32>
    %86 = arith.mulf %82, %85 : vector<1x32xf32>
    %87 = arith.mulf %84, %84 : vector<1x32xf32>
    %88 = arith.subf %86, %87 : vector<1x32xf32>
    %cst_41 = arith.constant 0.000000e+00 : f32
    %89 = vector.broadcast %cst_41 : f32 to vector<1x32xf32>
    %90 = arith.maximumf %88, %89 : vector<1x32xf32>
    %cst_42 = arith.constant 9.99999974E-6 : f32
    %91 = vector.broadcast %cst_42 : f32 to vector<1x32xf32>
    %92 = arith.addf %90, %91 : vector<1x32xf32>
    %93 = math.rsqrt %92 : vector<1x32xf32>
    %94 = arith.mulf %42, %93 : vector<1x32xf32>
    %95 = arith.mulf %84, %94 : vector<1x32xf32>
    %96 = arith.subf %44, %95 : vector<1x32xf32>
    %97 = vector.broadcast %94 : vector<1x32xf32> to vector<8x32xf32>
    %98 = arith.mulf %77, %97 : vector<8x32xf32>
    %99 = vector.broadcast %96 : vector<1x32xf32> to vector<8x32xf32>
    %100 = arith.addf %98, %99 : vector<8x32xf32>
    %c0_43 = arith.constant 0 : index
    %c0_44 = arith.constant 0 : index
    %101 = vector.load %arg8[%c0_43, %c0_44] : memref<32x1xf32, #tpu.memory_space<vmem>>, vector<32x1xf32>
    %cst_45 = arith.constant dense<0.000000e+00> : vector<8x1xf32>
    %102 = tpu.matmul %100, %101, %cst_45 {dimension_numbers = #tpu.dot_dimension_numbers<[1], [0], [0], [1], [0, 0, 1, 1], [], []>} : vector<8x32xf32>, vector<32x1xf32>, vector<8x1xf32> -> vector<8x1xf32>
    %c0_46 = arith.constant 0 : index
    %c0_47 = arith.constant 0 : index
    %103 = vector.load %arg9[%c0_46, %c0_47] : memref<1x1xf32, #tpu.memory_space<vmem>>, vector<1x1xf32>
    %104 = vector.broadcast %103 : vector<1x1xf32> to vector<8x1xf32>
    %105 = arith.addf %102, %104 : vector<8x1xf32>
    %cst_48 = arith.constant 0.000000e+00 : f32
    %106 = vector.broadcast %cst_48 : f32 to vector<8x1xf32>
    %107 = arith.cmpf oge, %105, %106 : vector<8x1xf32>
    %c0_49 = arith.constant 0 : index
    %c0_50 = arith.constant 0 : index
    %108 = vector.load %arg10[%c0_49, %c0_50] : memref<1x1xf32, #tpu.memory_space<vmem>>, vector<1x1xf32>
    %109 = vector.broadcast %108 : vector<1x1xf32> to vector<8x1xf32>
    %110 = arith.mulf %109, %105 : vector<8x1xf32>
    %111 = arith.select %107, %105, %110 : vector<8x1xi1>, vector<8x1xf32>
    %c0_51 = arith.constant 0 : index
    %c0_52 = arith.constant 0 : index
    %112 = vector.load %arg11[%c0_51, %c0_52] : memref<8x8xf32, #tpu.memory_space<vmem>>, vector<8x8xf32>
    %cst_53 = arith.constant dense<0.000000e+00> : vector<1x8xf32>
    %113 = tpu.matmul %111, %112, %cst_53 {dimension_numbers = #tpu.dot_dimension_numbers<[0], [0], [1], [1], [0, 1, 1, 1], [], []>} : vector<8x1xf32>, vector<8x8xf32>, vector<1x8xf32> -> vector<1x8xf32>
    %c0_54 = arith.constant 0 : index
    %c0_55 = arith.constant 0 : index
    %114 = vector.load %arg12[%c0_54, %c0_55] : memref<1x8xf32, #tpu.memory_space<vmem>>, vector<1x8xf32>
    %115 = arith.addf %113, %114 : vector<1x8xf32>
    %cst_56 = arith.constant 0.000000e+00 : f32
    %116 = vector.broadcast %14 : f32 to vector<1x8xf32>
    %117 = vector.broadcast %cst_56 : f32 to vector<1x8xf32>
    %118 = arith.select %7, %116, %117 : vector<1x8xi1>, vector<1x8xf32>
    %119 = arith.addf %115, %118 : vector<1x8xf32>
    %120 = vector.shape_cast %119 : vector<1x8xf32> to vector<1x1x8xf32>
    %c0_57 = arith.constant 0 : index
    %c0_58 = arith.constant 0 : index
    %c0_59 = arith.constant 0 : index
    %121 = vector.load %arg13[%c0_57, %c0_58, %c0_59] : memref<1x1x8xf32, #tpu.memory_space<vmem>>, vector<1x1x8xf32>
    tpu.vector_store %arg13[%c0_57, %c0_58, %c0_59], %120 {strides = array<i32>} : memref<1x1x8xf32, #tpu.memory_space<vmem>>, vector<1x1x8xf32>,
    return
  }
  func.func @transform_0(%arg0: i32) -> (i32, i32, i32) {
    %c0_i32 = arith.constant 0 : i32
    %c0_i32_0 = arith.constant 0 : i32
    %c0_i32_1 = arith.constant 0 : i32
    return %arg0, %c0_i32, %c0_i32_0 : i32, i32, i32
  }
  func.func @transform_1(%arg0: i32) -> (i32, i32, i32) {
    %c0_i32 = arith.constant 0 : i32
    %c0_i32_0 = arith.constant 0 : i32
    %c0_i32_1 = arith.constant 0 : i32
    %c0_i32_2 = arith.constant 0 : i32
    return %c0_i32, %c0_i32_0, %c0_i32_1 : i32, i32, i32
  }
  func.func @transform_2(%arg0: i32) -> (i32, i32, i32) {
    %c0_i32 = arith.constant 0 : i32
    %c0_i32_0 = arith.constant 0 : i32
    %c0_i32_1 = arith.constant 0 : i32
    %c0_i32_2 = arith.constant 0 : i32
    return %c0_i32, %c0_i32_0, %c0_i32_1 : i32, i32, i32
  }
  func.func @transform_3(%arg0: i32) -> (i32, i32, i32) {
    %c0_i32 = arith.constant 0 : i32
    %c0_i32_0 = arith.constant 0 : i32
    %c0_i32_1 = arith.constant 0 : i32
    %c0_i32_2 = arith.constant 0 : i32
    return %c0_i32, %c0_i32_0, %c0_i32_1 : i32, i32, i32
  }
  func.func @transform_4(%arg0: i32) -> (i32, i32, i32) {
    %c0_i32 = arith.constant 0 : i32
    %c0_i32_0 = arith.constant 0 : i32
    %c0_i32_1 = arith.constant 0 : i32
    %c0_i32_2 = arith.constant 0 : i32
    return %c0_i32, %c0_i32_0, %c0_i32_1 : i32, i32, i32
  }
  func.func @transform_5(%arg0: i32) -> (i32, i32, i32) {
    %c0_i32 = arith.constant 0 : i32
    %c0_i32_0 = arith.constant 0 : i32
    %c0_i32_1 = arith.constant 0 : i32
    %c0_i32_2 = arith.constant 0 : i32
    return %c0_i32, %c0_i32_0, %c0_i32_1 : i32, i32, i32
  }
  func.func @transform_6(%arg0: i32) -> (i32, i32, i32) {
    %c0_i32 = arith.constant 0 : i32
    %c0_i32_0 = arith.constant 0 : i32
    %c0_i32_1 = arith.constant 0 : i32
    %c0_i32_2 = arith.constant 0 : i32
    return %c0_i32, %c0_i32_0, %c0_i32_1 : i32, i32, i32
  }
  func.func @transform_7(%arg0: i32) -> (i32, i32) {
    %c0_i32 = arith.constant 0 : i32
    %c0_i32_0 = arith.constant 0 : i32
    %c0_i32_1 = arith.constant 0 : i32
    return %c0_i32, %c0_i32_0 : i32, i32
  }
  func.func @transform_8(%arg0: i32) -> (i32, i32) {
    %c0_i32 = arith.constant 0 : i32
    %c0_i32_0 = arith.constant 0 : i32
    %c0_i32_1 = arith.constant 0 : i32
    return %c0_i32, %c0_i32_0 : i32, i32
  }
  func.func @transform_9(%arg0: i32) -> (i32, i32) {
    %c0_i32 = arith.constant 0 : i32
    %c0_i32_0 = arith.constant 0 : i32
    %c0_i32_1 = arith.constant 0 : i32
    return %c0_i32, %c0_i32_0 : i32, i32
  }
  func.func @transform_10(%arg0: i32) -> (i32, i32) {
    %c0_i32 = arith.constant 0 : i32
    %c0_i32_0 = arith.constant 0 : i32
    %c0_i32_1 = arith.constant 0 : i32
    return %c0_i32, %c0_i32_0 : i32, i32
  }
  func.func @transform_11(%arg0: i32) -> (i32, i32) {
    %c0_i32 = arith.constant 0 : i32
    %c0_i32_0 = arith.constant 0 : i32
    %c0_i32_1 = arith.constant 0 : i32
    return %c0_i32, %c0_i32_0 : i32, i32
  }
  func.func @transform_12(%arg0: i32) -> (i32, i32, i32) {
    %c0_i32 = arith.constant 0 : i32
    %c0_i32_0 = arith.constant 0 : i32
    %c0_i32_1 = arith.constant 0 : i32
    return %arg0, %c0_i32, %c0_i32_0 : i32, i32, i32
  }
}

</mosaic_0001>

<llo_original>
// kernel: tpu_custom_call.1
$region0: #{tpu_custom_call.1}
  #allocation0 [shape = 'u32[]', space=smem, size = 0x4, offset = 0x4, fixed_abs, tag = 'smem constant byte address 0x4 - core index']
  #allocation1 [shape = 'u32[72,128]{1,0:T(1,128)}', space=vmem, size = 0x9000, scoped, tag = 'internal scratch']
  #allocation2 [shape = 'f32[1,1]{1,0:T(1,128)S(1)}', space=vmem, size = 0x200, scoped, tag = 'scoped memory for tpu_custom_call.1']
  #allocation3 [shape = 'f32[1,1]{1,0:T(1,128)S(1)}', space=vmem, size = 0x200, scoped, tag = 'scoped memory for tpu_custom_call.1']
  %s0 = inlined_call_operand.hbm [shape: f32[2,8,32], index: 0, kind: input, shape index: {}]
  %s1 = inlined_call_operand.vmem [shape: f32[1,2,8], index: 1, kind: input, shape index: {}]
  %s2 = inlined_call_operand.vmem [shape: f32[1,2,1], index: 2, kind: input, shape index: {}]
  %s3 = inlined_call_operand.vmem [shape: f32[1,32,32], index: 3, kind: input, shape index: {}]
  %s4 = inlined_call_operand.vmem [shape: f32[1,1,32], index: 4, kind: input, shape index: {}]
  %s5 = inlined_call_operand.hbm [shape: f32[1,1,32], index: 5, kind: input, shape index: {}]
  %s6 = inlined_call_operand.hbm [shape: f32[1,1,32], index: 6, kind: input, shape index: {}]
  %s7 = inlined_call_operand.vmem [shape: f32[32,1], index: 7, kind: input, shape index: {}]
  %s8 = inlined_call_operand.<no memory space> [shape: f32[1,1], index: 8, kind: input, shape index: {}]
  %s9 = inlined_call_operand.<no memory space> [shape: f32[1,1], index: 9, kind: input, shape index: {}]
  %s10 = inlined_call_operand.vmem [shape: f32[8,8], index: 10, kind: input, shape index: {}]
  %s11 = inlined_call_operand.vmem [shape: f32[1,8], index: 11, kind: input, shape index: {}]
  %s12 = inlined_call_operand.hbm [shape: f32[2,1,8], index: 12, kind: output, shape index: {}]
  %s13 = sld [smem:[#allocation0]]
  $region93: #{tpu_custom_call.1} parent=0
    _
  %s15 = ssub.s32 1, %s13
  %s16 = scalar_select 0, %s15, %s13
  %v17 = vstv %s8
  %18 = vst [vmem:[#allocation2] sm:$0x1] %v17
  %v19 = vstv %s9
  %20 = vst [vmem:[#allocation3] sm:$0x1] %v19
  $region1: #{tpu_custom_call.1} parent=0
    #allocation4 [shape = 'u8[8192]{0}', space=vmem, size = 0x2000, scoped, tag = 'input window, operand 0']
    #allocation5 [shape = 's32[2]{0}', space=sflag, size = 0x8, scoped, tag = 'scoped memory for tpu_custom_call.1']
    #allocation6 [shape = 's32[2]{0}', space=sflag, size = 0x8, scoped, tag = 'scoped memory for tpu_custom_call.1']
    #allocation7 [shape = 'u8[512]{0}', space=vmem, size = 0x400, scoped, tag = 'input window, operand 5, single buffered']
    #allocation8 [shape = 's32[1]{0}', space=sflag, size = 0x4, scoped, tag = 'scoped memory for tpu_custom_call.1']
    #allocation9 [shape = 'u8[512]{0}', space=vmem, size = 0x400, scoped, tag = 'input window, operand 6, single buffered']
    #allocation10 [shape = 'u8[1024]{0}', space=vmem, size = 0x400, scoped, tag = 'output window, operand 0']
    %21 = vsyncpa [#allocation5], 0
    %s22 = scalar_lea.sflag [#allocation5], 1
    %23 = vsyncpa %s22, 0
    %24 = vsyncpa [#allocation8], 0
    %25 = vsyncpa [#allocation6], 0
    %s26 = scalar_lea.sflag [#allocation6], 1
    %27 = vsyncpa %s26, 0
    loop: start=0, step=1, limit=4
    $region2: #{tpu_custom_call.1} parent=1 // loop_pre_header
      _
    $region3: #{tpu_custom_call.1} parent=1 // loop_header
      %s29 = sphi 0, %s33
      %p30 = scmp.ge.s32.totalorder %s29, 4
      %s39 = sphi 0, %s41
      %s42 = sphi 0, %s39
      %s43 = sphi 0, %s42
      %s59 = sphi 0, %s43
      %s63 = sphi 0, %s63
      %s65 = sphi 0, %s63
      %s66 = sphi 0, %s65
      %s80 = sphi 0, %s66
      %s84 = sphi 0, %s84
      %s86 = sphi 0, %s84
      %s87 = sphi 0, %s86
      %s101 = sphi 0, %s87
      %s105 = sphi 0, %s105
      %s107 = sphi 0, %s105
      %s108 = sphi 0, %s107
      %s122 = sphi 0, %s108
      %s126 = sphi 0, %s126
      %s128 = sphi 0, %s126
      %s129 = sphi 0, %s128
      %s143 = sphi 0, %s129
      %s147 = sphi 0, %s147
      %s149 = sphi 0, %s147
      %s150 = sphi 0, %s149
      %s164 = sphi 0, %s150
      %s168 = sphi 0, %s168
      %s170 = sphi 0, %s168
      %s171 = sphi 0, %s170
      %s185 = sphi 0, %s171
      %s189 = sphi 0, %s189
      %s191 = sphi 0, %s189
      %s192 = sphi 0, %s191
      %s206 = sphi 0, %s192
      %s210 = sphi 0, %s210
      %s212 = sphi 0, %s210
      %s213 = sphi 0, %s212
      %s227 = sphi 0, %s213
      %s231 = sphi 0, %s231
      %s233 = sphi 0, %s231
      %s234 = sphi 0, %s233
      %s248 = sphi 0, %s234
      %s252 = sphi 0, %s252
      %s254 = sphi 0, %s252
      %s255 = sphi 0, %s254
      %s269 = sphi 0, %s255
      %s273 = sphi 0, %s273
      %s275 = sphi 0, %s273
      %s276 = sphi 0, %s275
      %s290 = sphi 0, %s276
      %s296 = sphi 0, %s298
      %s299 = sphi 0, %s296
      %s300 = sphi 0, %s299
      %s316 = sphi 0, %s300
    $region4: #{tpu_custom_call.1} parent=1 // loop_header_branch
      %32 = sbr.rel (%p30) target = $region8
    $region5: #{tpu_custom_call.1} parent=1 // loop_body
      %s34 = ssub.s32 %s29, 1
      %s35 = ssub.s32 %s29, 2
      %s36 = sadd.s32 %s29, 1
      %s37 = ssub.s32 %s29, %s36
      %p38 = scmp.eq.s32.totalorder %s37, 0
      %s40 = sadd.s32 %s39, 1
      %s41 = scalar_select %p38, %s39, %s40
      %p44 = pneg %p38
      %p45 = scmp.eq.s32.totalorder %s29, 1
      %p46 = por %p44, %p45
      %p47 = scmp.ne.s32.totalorder %s39, %s42
      %p48 = scmp.eq.s32.totalorder %s29, 0
      %p49 = por %p47, %p48
      %p50 = scmp.ne.s32.totalorder %s39, %s42
      %p51 = scmp.eq.s32.totalorder %s34, 1
      %p52 = por %p50, %p51
      %p53 = scmp.ne.s32.totalorder %s42, %s43
      %p54 = scmp.eq.s32.totalorder %s34, 0
      %p55 = por %p53, %p54
      %p56 = scmp.ne.s32.totalorder %s42, %s43
      %p57 = scmp.eq.s32.totalorder %s35, 1
      %p58 = por %p56, %p57
      %p60 = scmp.ne.s32.totalorder %s43, %s59
      %p61 = scmp.eq.s32.totalorder %s35, 0
      %p62 = por %p60, %p61
      %s64 = sadd.s32 %s63, 1
      %p67 = scmp.eq.s32.totalorder %s29, 1
      %p68 = scmp.ne.s32.totalorder %s63, %s65
      %p69 = scmp.eq.s32.totalorder %s29, 0
      %p70 = por %p68, %p69
      %p71 = scmp.ne.s32.totalorder %s63, %s65
      %p72 = scmp.eq.s32.totalorder %s34, 1
      %p73 = por %p71, %p72
      %p74 = scmp.ne.s32.totalorder %s65, %s66
      %p75 = scmp.eq.s32.totalorder %s34, 0
      %p76 = por %p74, %p75
      %p77 = scmp.ne.s32.totalorder %s65, %s66
      %p78 = scmp.eq.s32.totalorder %s35, 1
      %p79 = por %p77, %p78
      %p81 = scmp.ne.s32.totalorder %s66, %s80
      %p82 = scmp.eq.s32.totalorder %s35, 0
      %p83 = por %p81, %p82
      %s85 = sadd.s32 %s84, 1
      %p88 = scmp.eq.s32.totalorder %s29, 1
      %p89 = scmp.ne.s32.totalorder %s84, %s86
      %p90 = scmp.eq.s32.totalorder %s29, 0
      %p91 = por %p89, %p90
      %p92 = scmp.ne.s32.totalorder %s84, %s86
      %p93 = scmp.eq.s32.totalorder %s34, 1
      %p94 = por %p92, %p93
      %p95 = scmp.ne.s32.totalorder %s86, %s87
      %p96 = scmp.eq.s32.totalorder %s34, 0
      %p97 = por %p95, %p96
      %p98 = scmp.ne.s32.totalorder %s86, %s87
      %p99 = scmp.eq.s32.totalorder %s35, 1
      %p100 = por %p98, %p99
      %p102 = scmp.ne.s32.totalorder %s87, %s101
      %p103 = scmp.eq.s32.totalorder %s35, 0
      %p104 = por %p102, %p103
      %s106 = sadd.s32 %s105, 1
      %p109 = scmp.eq.s32.totalorder %s29, 1
      %p110 = scmp.ne.s32.totalorder %s105, %s107
      %p111 = scmp.eq.s32.totalorder %s29, 0
      %p112 = por %p110, %p111
      %p113 = scmp.ne.s32.totalorder %s105, %s107
      %p114 = scmp.eq.s32.totalorder %s34, 1
      %p115 = por %p113, %p114
      %p116 = scmp.ne.s32.totalorder %s107, %s108
      %p117 = scmp.eq.s32.totalorder %s34, 0
      %p118 = por %p116, %p117
      %p119 = scmp.ne.s32.totalorder %s107, %s108
      %p120 = scmp.eq.s32.totalorder %s35, 1
      %p121 = por %p119, %p120
      %p123 = scmp.ne.s32.totalorder %s108, %s122
      %p124 = scmp.eq.s32.totalorder %s35, 0
      %p125 = por %p123, %p124
      %s127 = sadd.s32 %s126, 1
      %p130 = scmp.eq.s32.totalorder %s29, 1
      %p131 = scmp.ne.s32.totalorder %s126, %s128
      %p132 = scmp.eq.s32.totalorder %s29, 0
      %p133 = por %p131, %p132
      %p134 = scmp.ne.s32.totalorder %s126, %s128
      %p135 = scmp.eq.s32.totalorder %s34, 1
      %p136 = por %p134, %p135
      %p137 = scmp.ne.s32.totalorder %s128, %s129
      %p138 = scmp.eq.s32.totalorder %s34, 0
      %p139 = por %p137, %p138
      %p140 = scmp.ne.s32.totalorder %s128, %s129
      %p141 = scmp.eq.s32.totalorder %s35, 1
      %p142 = por %p140, %p141
      %p144 = scmp.ne.s32.totalorder %s129, %s143
      %p145 = scmp.eq.s32.totalorder %s35, 0
      %p146 = por %p144, %p145
      %s148 = sadd.s32 %s147, 1
      %p151 = scmp.eq.s32.totalorder %s29, 1
      %p152 = scmp.ne.s32.totalorder %s147, %s149
      %p153 = scmp.eq.s32.totalorder %s29, 0
      %p154 = por %p152, %p153
      %p155 = scmp.ne.s32.totalorder %s147, %s149
      %p156 = scmp.eq.s32.totalorder %s34, 1
      %p157 = por %p155, %p156
      %p158 = scmp.ne.s32.totalorder %s149, %s150
      %p159 = scmp.eq.s32.totalorder %s34, 0
      %p160 = por %p158, %p159
      %p161 = scmp.ne.s32.totalorder %s149, %s150
      %p162 = scmp.eq.s32.totalorder %s35, 1
      %p163 = por %p161, %p162
      %p165 = scmp.ne.s32.totalorder %s150, %s164
      %p166 = scmp.eq.s32.totalorder %s35, 0
      %p167 = por %p165, %p166
      %s169 = sadd.s32 %s168, 1
      %p172 = scmp.eq.s32.totalorder %s29, 1
      %p173 = scmp.ne.s32.totalorder %s168, %s170
      %p174 = scmp.eq.s32.totalorder %s29, 0
      %p175 = por %p173, %p174
      %p176 = scmp.ne.s32.totalorder %s168, %s170
      %p177 = scmp.eq.s32.totalorder %s34, 1
      %p178 = por %p176, %p177
      %p179 = scmp.ne.s32.totalorder %s170, %s171
      %p180 = scmp.eq.s32.totalorder %s34, 0
      %p181 = por %p179, %p180
      %p182 = scmp.ne.s32.totalorder %s170, %s171
      %p183 = scmp.eq.s32.totalorder %s35, 1
      %p184 = por %p182, %p183
      %p186 = scmp.ne.s32.totalorder %s171, %s185
      %p187 = scmp.eq.s32.totalorder %s35, 0
      %p188 = por %p186, %p187
      %s190 = sadd.s32 %s189, 1
      %p193 = scmp.eq.s32.totalorder %s29, 1
      %p194 = scmp.ne.s32.totalorder %s189, %s191
      %p195 = scmp.eq.s32.totalorder %s29, 0
      %p196 = por %p194, %p195
      %p197 = scmp.ne.s32.totalorder %s189, %s191
      %p198 = scmp.eq.s32.totalorder %s34, 1
      %p199 = por %p197, %p198
      %p200 = scmp.ne.s32.totalorder %s191, %s192
      %p201 = scmp.eq.s32.totalorder %s34, 0
      %p202 = por %p200, %p201
      %p203 = scmp.ne.s32.totalorder %s191, %s192
      %p204 = scmp.eq.s32.totalorder %s35, 1
      %p205 = por %p203, %p204
      %p207 = scmp.ne.s32.totalorder %s192, %s206
      %p208 = scmp.eq.s32.totalorder %s35, 0
      %p209 = por %p207, %p208
      %s211 = sadd.s32 %s210, 1
      %p214 = scmp.eq.s32.totalorder %s29, 1
      %p215 = scmp.ne.s32.totalorder %s210, %s212
      %p216 = scmp.eq.s32.totalorder %s29, 0
      %p217 = por %p215, %p216
      %p218 = scmp.ne.s32.totalorder %s210, %s212
      %p219 = scmp.eq.s32.totalorder %s34, 1
      %p220 = por %p218, %p219
      %p221 = scmp.ne.s32.totalorder %s212, %s213
      %p222 = scmp.eq.s32.totalorder %s34, 0
      %p223 = por %p221, %p222
      %p224 = scmp.ne.s32.totalorder %s212, %s213
      %p225 = scmp.eq.s32.totalorder %s35, 1
      %p226 = por %p224, %p225
      %p228 = scmp.ne.s32.totalorder %s213, %s227
      %p229 = scmp.eq.s32.totalorder %s35, 0
      %p230 = por %p228, %p229
      %s232 = sadd.s32 %s231, 1
      %p235 = scmp.eq.s32.totalorder %s29, 1
      %p236 = scmp.ne.s32.totalorder %s231, %s233
      %p237 = scmp.eq.s32.totalorder %s29, 0
      %p238 = por %p236, %p237
      %p239 = scmp.ne.s32.totalorder %s231, %s233
      %p240 = scmp.eq.s32.totalorder %s34, 1
      %p241 = por %p239, %p240
      %p242 = scmp.ne.s32.totalorder %s233, %s234
      %p243 = scmp.eq.s32.totalorder %s34, 0
      %p244 = por %p242, %p243
      %p245 = scmp.ne.s32.totalorder %s233, %s234
      %p246 = scmp.eq.s32.totalorder %s35, 1
      %p247 = por %p245, %p246
      %p249 = scmp.ne.s32.totalorder %s234, %s248
      %p250 = scmp.eq.s32.totalorder %s35, 0
      %p251 = por %p249, %p250
      %s253 = sadd.s32 %s252, 1
      %p256 = scmp.eq.s32.totalorder %s29, 1
      %p257 = scmp.ne.s32.totalorder %s252, %s254
      %p258 = scmp.eq.s32.totalorder %s29, 0
      %p259 = por %p257, %p258
      %p260 = scmp.ne.s32.totalorder %s252, %s254
      %p261 = scmp.eq.s32.totalorder %s34, 1
      %p262 = por %p260, %p261
      %p263 = scmp.ne.s32.totalorder %s254, %s255
      %p264 = scmp.eq.s32.totalorder %s34, 0
      %p265 = por %p263, %p264
      %p266 = scmp.ne.s32.totalorder %s254, %s255
      %p267 = scmp.eq.s32.totalorder %s35, 1
      %p268 = por %p266, %p267
      %p270 = scmp.ne.s32.totalorder %s255, %s269
      %p271 = scmp.eq.s32.totalorder %s35, 0
      %p272 = por %p270, %p271
      %s274 = sadd.s32 %s273, 1
      %p277 = scmp.eq.s32.totalorder %s29, 1
      %p278 = scmp.ne.s32.totalorder %s273, %s275
      %p279 = scmp.eq.s32.totalorder %s29, 0
      %p280 = por %p278, %p279
      %p281 = scmp.ne.s32.totalorder %s273, %s275
      %p282 = scmp.eq.s32.totalorder %s34, 1
      %p283 = por %p281, %p282
      %p284 = scmp.ne.s32.totalorder %s275, %s276
      %p285 = scmp.eq.s32.totalorder %s34, 0
      %p286 = por %p284, %p285
      %p287 = scmp.ne.s32.totalorder %s275, %s276
      %p288 = scmp.eq.s32.totalorder %s35, 1
      %p289 = por %p287, %p288
      %p291 = scmp.ne.s32.totalorder %s276, %s290
      %p292 = scmp.eq.s32.totalorder %s35, 0
      %p293 = por %p291, %p292
      %s294 = ssub.s32 %s29, %s36
      %p295 = scmp.eq.s32.totalorder %s294, 0
      %s297 = sadd.s32 %s296, 1
      %s298 = scalar_select %p295, %s296, %s297
      %p301 = pneg %p295
      %p302 = scmp.eq.s32.totalorder %s29, 1
      %p303 = por %p301, %p302
      %p304 = scmp.ne.s32.totalorder %s296, %s299
      %p305 = scmp.eq.s32.totalorder %s29, 0
      %p306 = por %p304, %p305
      %p307 = scmp.ne.s32.totalorder %s296, %s299
      %p308 = scmp.eq.s32.totalorder %s34, 1
      %p309 = por %p307, %p308
      %p310 = scmp.ne.s32.totalorder %s299, %s300
      %p311 = scmp.eq.s32.totalorder %s34, 0
      %p312 = por %p310, %p311
      %p313 = scmp.ne.s32.totalorder %s299, %s300
      %p314 = scmp.eq.s32.totalorder %s35, 1
      %p315 = por %p313, %p314
      %p317 = scmp.ne.s32.totalorder %s300, %s316
      %p318 = scmp.eq.s32.totalorder %s35, 0
      %p319 = por %p317, %p318
      %p320 = scmp.le.s32.totalorder 1, %s29
      %p321 = scmp.lt.s32.totalorder %s29, 3
      %p322 = pnand %p320, %p321
      %p323 = pneg %p322
      // Predicated region
      $region9: #{tpu_custom_call.1} parent=5 // pred_check
        _
      $region10: #{tpu_custom_call.1} parent=5 // pred_check_branch
        %325 = sbr.rel (%p322) target = $region12
      $region11: #{tpu_custom_call.1} parent=5 // pred_region
        %s326 = ssub.s32 %s29, 1
        // Predicated region
        $region13: #{tpu_custom_call.1} parent=11 // pred_check
          %p327 = pneg %p76
        $region14: #{tpu_custom_call.1} parent=11 // pred_check_branch
          %329 = sbr.rel (%p327) target = $region16
        $region15: #{tpu_custom_call.1} parent=11 // pred_region
          _
        $region16: #{tpu_custom_call.1} parent=11 // pred_fallthru
          _
        // Predicated region
        $region17: #{tpu_custom_call.1} parent=11 // pred_check
          %p330 = pneg %p97
        $region18: #{tpu_custom_call.1} parent=11 // pred_check_branch
          %332 = sbr.rel (%p330) target = $region20
        $region19: #{tpu_custom_call.1} parent=11 // pred_region
          _
        $region20: #{tpu_custom_call.1} parent=11 // pred_fallthru
          _
        // Predicated region
        $region21: #{tpu_custom_call.1} parent=11 // pred_check
          %p333 = pneg %p118
        $region22: #{tpu_custom_call.1} parent=11 // pred_check_branch
          %335 = sbr.rel (%p333) target = $region24
        $region23: #{tpu_custom_call.1} parent=11 // pred_region
          _
        $region24: #{tpu_custom_call.1} parent=11 // pred_fallthru
          _
        // Predicated region
        $region25: #{tpu_custom_call.1} parent=11 // pred_check
          %p336 = pneg %p139
        $region26: #{tpu_custom_call.1} parent=11 // pred_check_branch
          %338 = sbr.rel (%p336) target = $region28
        $region27: #{tpu_custom_call.1} parent=11 // pred_region
          _
        $region28: #{tpu_custom_call.1} parent=11 // pred_fallthru
          _
        // Predicated region
        $region29: #{tpu_custom_call.1} parent=11 // pred_check
          %p339 = pneg %p160
        $region30: #{tpu_custom_call.1} parent=11 // pred_check_branch
          %341 = sbr.rel (%p339) target = $region32
        $region31: #{tpu_custom_call.1} parent=11 // pred_region
          %343 = vsyncadd [#allocation8], 0
          %s345 = sshll.u32 %s5, 4
          %s346 = int_to_ptr.hbm [resolvable:$true] %s345
          %s347 = sshll.u32 [#allocation7], 4
          %s348 = int_to_ptr.vmem [resolvable:$true] %s347
          %350 = dma.hbm_to_vmem [thread:$0]  %s346, 16, %s348, [#allocation8]
        $region32: #{tpu_custom_call.1} parent=11 // pred_fallthru
          _
        // Predicated region
        $region33: #{tpu_custom_call.1} parent=11 // pred_check
          %p351 = pneg %p181
        $region34: #{tpu_custom_call.1} parent=11 // pred_check_branch
          %353 = sbr.rel (%p351) target = $region36
        $region35: #{tpu_custom_call.1} parent=11 // pred_region
          %355 = vsyncadd [#allocation8], 0
          %s357 = sshll.u32 %s6, 4
          %s358 = int_to_ptr.hbm [resolvable:$true] %s357
          %s359 = sshll.u32 [#allocation9], 4
          %s360 = int_to_ptr.vmem [resolvable:$true] %s359
          %362 = dma.hbm_to_vmem [thread:$0]  %s358, 16, %s360, [#allocation8]
        $region36: #{tpu_custom_call.1} parent=11 // pred_fallthru
          _
        // Predicated region
        $region37: #{tpu_custom_call.1} parent=11 // pred_check
          %p363 = pneg %p202
        $region38: #{tpu_custom_call.1} parent=11 // pred_check_branch
          %365 = sbr.rel (%p363) target = $region40
        $region39: #{tpu_custom_call.1} parent=11 // pred_region
          _
        $region40: #{tpu_custom_call.1} parent=11 // pred_fallthru
          _
        // Predicated region
        $region41: #{tpu_custom_call.1} parent=11 // pred_check
          %p366 = pneg %p223
        $region42: #{tpu_custom_call.1} parent=11 // pred_check_branch
          %368 = sbr.rel (%p366) target = $region44
        $region43: #{tpu_custom_call.1} parent=11 // pred_region
          _
        $region44: #{tpu_custom_call.1} parent=11 // pred_fallthru
          _
        // Predicated region
        $region45: #{tpu_custom_call.1} parent=11 // pred_check
          %p369 = pneg %p244
        $region46: #{tpu_custom_call.1} parent=11 // pred_check_branch
          %371 = sbr.rel (%p369) target = $region48
        $region47: #{tpu_custom_call.1} parent=11 // pred_region
          _
        $region48: #{tpu_custom_call.1} parent=11 // pred_fallthru
          _
        // Predicated region
        $region49: #{tpu_custom_call.1} parent=11 // pred_check
          %p372 = pneg %p265
        $region50: #{tpu_custom_call.1} parent=11 // pred_check_branch
          %374 = sbr.rel (%p372) target = $region52
        $region51: #{tpu_custom_call.1} parent=11 // pred_region
          _
        $region52: #{tpu_custom_call.1} parent=11 // pred_fallthru
          _
        // Predicated region
        $region53: #{tpu_custom_call.1} parent=11 // pred_check
          %p375 = pneg %p286
        $region54: #{tpu_custom_call.1} parent=11 // pred_check_branch
          %377 = sbr.rel (%p375) target = $region56
        $region55: #{tpu_custom_call.1} parent=11 // pred_region
          _
        $region56: #{tpu_custom_call.1} parent=11 // pred_fallthru
          _
      $region12: #{tpu_custom_call.1} parent=5 // pred_fallthru
        _
      %p378 = scmp.lt.s32.totalorder %s29, 2
      // Predicated region
      $region57: #{tpu_custom_call.1} parent=5 // pred_check
        %p379 = pneg %p378
      $region58: #{tpu_custom_call.1} parent=5 // pred_check_branch
        %381 = sbr.rel (%p379) target = $region60
      $region59: #{tpu_custom_call.1} parent=5 // pred_region
        // Predicated region
        $region61: #{tpu_custom_call.1} parent=59 // pred_check
          %p382 = pneg %p49
        $region62: #{tpu_custom_call.1} parent=59 // pred_check_branch
          %384 = sbr.rel (%p382) target = $region64
        $region63: #{tpu_custom_call.1} parent=59 // pred_region
          %s385 = sand.u32 %s39, 1
          %s386 = scalar_lea.sflag [#allocation5], %s385
          %s387 = sand.u32 %s39, 1
          %s388 = smul.addr %s387, 8
          %s389 = scalar_lea.vmem [#allocation4], %s388
          %391 = vsyncadd %s386, 0
          %s392 = smul.addr %s29, 8
          %s393 = scalar_lea.hbm %s0, %s392
          %s395 = sshll.u32 %s393, 4
          %s396 = int_to_ptr.hbm [resolvable:$true] %s395
          %s397 = sshll.u32 %s389, 4
          %s398 = int_to_ptr.vmem [resolvable:$true] %s397
          %400 = dma.hbm_to_vmem [thread:$0]  %s396, 128, %s398, %s386
        $region64: #{tpu_custom_call.1} parent=59 // pred_fallthru
          _
      $region60: #{tpu_custom_call.1} parent=5 // pred_fallthru
        _
      %p401 = scmp.le.s32.totalorder 1, %s29
      %p402 = scmp.lt.s32.totalorder %s29, 3
      %p403 = pnand %p401, %p402
      %p404 = pneg %p403
      // Predicated region
      $region65: #{tpu_custom_call.1} parent=5 // pred_check
        _
      $region66: #{tpu_custom_call.1} parent=5 // pred_check_branch
        %406 = sbr.rel (%p403) target = $region68
      $region67: #{tpu_custom_call.1} parent=5 // pred_region
        %s407 = ssub.s32 %s29, 1
        %s408 = sand.u32 %s42, 1
        %s409 = scalar_lea.sflag [#allocation5], %s408
        %s410 = sand.u32 %s42, 1
        %s411 = smul.addr %s410, 8
        %s412 = scalar_lea.vmem [#allocation4], %s411
        // Predicated region
        $region69: #{tpu_custom_call.1} parent=67 // pred_check
          %p413 = pneg %p55
        $region70: #{tpu_custom_call.1} parent=67 // pred_check_branch
          %415 = sbr.rel (%p413) target = $region72
        $region71: #{tpu_custom_call.1} parent=67 // pred_region
          %417 = dma.done %s409, 128
        $region72: #{tpu_custom_call.1} parent=67 // pred_fallthru
          _
        // Predicated region
        $region73: #{tpu_custom_call.1} parent=67 // pred_check
          %p418 = pneg %p160
        $region74: #{tpu_custom_call.1} parent=67 // pred_check_branch
          %420 = sbr.rel (%p418) target = $region76
        $region75: #{tpu_custom_call.1} parent=67 // pred_region
          %422 = dma.done [#allocation8], 16
        $region76: #{tpu_custom_call.1} parent=67 // pred_fallthru
          _
        // Predicated region
        $region77: #{tpu_custom_call.1} parent=67 // pred_check
          %p423 = pneg %p181
        $region78: #{tpu_custom_call.1} parent=67 // pred_check_branch
          %425 = sbr.rel (%p423) target = $region80
        $region79: #{tpu_custom_call.1} parent=67 // pred_region
          %427 = dma.done [#allocation8], 16
        $region80: #{tpu_custom_call.1} parent=67 // pred_fallthru
          _
        %s428 = sand.u32 %s42, 1
        %s429 = scalar_lea.sflag [#allocation5], %s428
        %s430 = sand.u32 %s42, 1
        %s431 = smul.addr %s430, 8
        %s432 = scalar_lea.vmem [#allocation4], %s431
        %p433 = pneg %p55
        %p434 = pneg %p52
        %p435 = pneg %p76
        %p436 = pneg %p73
        %p437 = pneg %p97
        %p438 = pneg %p94
        %p439 = pneg %p118
        %p440 = pneg %p115
        %p441 = pneg %p139
        %p442 = pneg %p136
        %p443 = pneg %p160
        %p444 = pneg %p157
        %p445 = pneg %p181
        %p446 = pneg %p178
        %p447 = pneg %p202
        %p448 = pneg %p199
        %p449 = pneg %p223
        %p450 = pneg %p220
        %p451 = pneg %p244
        %p452 = pneg %p241
        %p453 = pneg %p265
        %p454 = pneg %p262
        %p455 = pneg %p286
        %p456 = pneg %p283
        %p457 = pneg %p312
        %p458 = pneg %p309
        %s459 = sand.u32 %s299, 1
        %s460 = scalar_lea.sflag [#allocation6], %s459
        %s461 = sand.u32 %s299, 1
        %s462 = scalar_lea.vmem [#allocation10], %s461
        %v463 = vld [vmem:[%s412] sm:$0xff]
        %v464 = vlaneseq
        %v465 = vand.u32 %v464, 127
        %vm466 = vcmp.eq.s32.totalorder %v465, 0
        %v467 = vsel %vm466, %v463, 0.0
        %vm468 = vcmask 261120
        %v469 = vsel %vm468, %v467, 0.0
        %470 = vadd.xlane.f32.xlu0 %v469
        %v471 = vpop.xlane.xlu0 %470
        %v472 = vrot.slane %v471, 4
        %v473 = vadd.f32 %v471, %v472
        %v474 = vrot.slane %v473, 2
        %v475 = vadd.f32 %v473, %v474
        %v476 = vrot.slane %v475, 1
        %v477 = vadd.f32 %v475, %v476
        %s478 = vtos %v477
        %s479 = smul.f32 %s478, 0.125
        %v480 = vstv %s479
        %v481 = vsel %vm466, %v480, 0.0
        %v482 = vsub.f32 %v463, %v481
        %v483 = vld [vmem:[%s1] sm:$0x3]
        %v484 = vld [vmem:[%s2] sm:$0x3]
        %486 = vset.pattern.permute.xlu0 0
        %487 = vperm.xlu0 %486, %v484
        %v488 = vpop.permute.xlu0 %487
        %vm490 = vcmask 64512
        %v492 = vsel %vm490, %v483, 0
        %494 = vmatpush.msra.mxu0 0.0
        %495 = vmatpush.msra.mxu0 0.0
        %496 = vmatpush.msra.mxu0 0.0
        %497 = vmatpush.msra.mxu0 0.0
        %498 = vmatpush.msra.mxu0 0.0
        %499 = vmatpush.msra.mxu0 0.0
        %500 = vmatpush.msra.mxu0 0.0
        %501 = vmatpush.msra.mxu0 0.0
        %502 = vmatpush.msra.mxu0 0.0
        %503 = vmatpush.msra.mxu0 0.0
        %504 = vmatpush.msra.mxu0 0.0
        %505 = vmatpush.msra.mxu0 0.0
        %506 = vmatpush.msra.mxu0 0.0
        %507 = vmatpush.msra.mxu0 0.0
        %508 = vmatpush.msra.mxu0 0.0
        %509 = vmatpush.msra.mxu0 %v482
        %510 = vmatmul.f32.gmra.mxu0 %v492
        %v511 = vpop.f32.mrf.mxu0
        %v512 = vadd.f32 %v488, %v511
        %513 = vdwg.mxu0
        %514 = vxpose.xlu0.b32.start [1/16] %v512, 128
        %515 = vxpose.xlu0.b32.cont [2/16] 0.0, 128
        %516 = vxpose.xlu0.b32.cont [3/16] 0.0, 128
        %517 = vxpose.xlu0.b32.cont [4/16] 0.0, 128
        %518 = vxpose.xlu0.b32.cont [5/16] 0.0, 128
        %519 = vxpose.xlu0.b32.cont [6/16] 0.0, 128
        %520 = vxpose.xlu0.b32.cont [7/16] 0.0, 128
        %521 = vxpose.xlu0.b32.cont [8/16] 0.0, 128
        %522 = vxpose.xlu0.b32.cont [9/16] 0.0, 128
        %523 = vxpose.xlu0.b32.cont [10/16] 0.0, 128
        %524 = vxpose.xlu0.b32.cont [11/16] 0.0, 128
        %525 = vxpose.xlu0.b32.cont [12/16] 0.0, 128
        %526 = vxpose.xlu0.b32.cont [13/16] 0.0, 128
        %527 = vxpose.xlu0.b32.cont [14/16] 0.0, 128
        %528 = vxpose.xlu0.b32.cont [15/16] 0.0, 128
        %529 = vxpose.xlu0.b32.end [16/16] 0.0, 128
        %v530 = vpop.trf.xlu0
        %v531 = vpop.trf.xlu0
        %v532 = vpop.trf.xlu0
        %v533 = vpop.trf.xlu0
        %v534 = vpop.trf.xlu0
        %v535 = vpop.trf.xlu0
        %v536 = vpop.trf.xlu0
        %v537 = vpop.trf.xlu0
        %v538 = vpop.trf.xlu0
        %v539 = vpop.trf.xlu0
        %v540 = vpop.trf.xlu0
        %v541 = vpop.trf.xlu0
        %v542 = vpop.trf.xlu0
        %v543 = vpop.trf.xlu0
        %v544 = vpop.trf.xlu0
        %v545 = vpop.trf.xlu0
        %v547 = vrot.slane %v512, 1
        %vm548 = vcmask 7168
        %v550 = vsel %vm548, %v530, 0
        %v553 = vsel %vm548, %v531, 0
        %v556 = vsel %vm548, %v532, 0
        %v559 = vsel %vm548, %v533, 0
        %vm561 = vcmask 1040384
        %v562 = vsel %vm561, %v547, 0
        %564 = vmatpush.msra.mxu0 0.0
        %565 = vmatpush.msra.mxu0 0.0
        %566 = vmatpush.msra.mxu0 0.0
        %567 = vmatpush.msra.mxu0 0.0
        %568 = vmatpush.msra.mxu0 0.0
        %569 = vmatpush.msra.mxu0 0.0
        %570 = vmatpush.msra.mxu0 0.0
        %571 = vmatpush.msra.mxu0 0.0
        %572 = vmatpush.msra.mxu0 0.0
        %573 = vmatpush.msra.mxu0 0.0
        %574 = vmatpush.msra.mxu0 0.0
        %575 = vmatpush.msra.mxu0 0.0
        %576 = vmatpush.msra.mxu0 0.0
        %577 = vmatpush.msra.mxu0 0.0
        %578 = vmatpush.msra.mxu0 0.0
        %579 = vmatpush.msra.mxu0 %v562
        %580 = vmatmul.f32.gmra.mxu0 %v550
        %v581 = vpop.f32.mrf.mxu0
        %v582 = vadd.f32 0.0, %v581
        %583 = vmatmul.f32.gmra.mxu0 %v553
        %v584 = vpop.f32.mrf.mxu0
        %v585 = vadd.f32 0.0, %v584
        %586 = vmatmul.f32.gmra.mxu0 %v556
        %v587 = vpop.f32.mrf.mxu0
        %v588 = vadd.f32 0.0, %v587
        %589 = vmatmul.f32.gmra.mxu0 %v559
        %v590 = vpop.f32.mrf.mxu0
        %v591 = vadd.f32 0.0, %v590
        %592 = vdwg.mxu0
        %v593 = vmul.f32 %v582, 0.17677669
        %v594 = vmul.f32 %v585, 0.17677669
        %v595 = vmul.f32 %v588, 0.17677669
        %v596 = vmul.f32 %v591, 0.17677669
        %v597 = vsel %vm468, %v593, -inf
        %598 = vmax.xlane.f32.xlu0 %v597
        %v599 = vpop.xlane.xlu0 %598
        %v600 = vsel %vm468, %v594, -inf
        %601 = vmax.xlane.f32.xlu0 %v600
        %v602 = vpop.xlane.xlu0 %601
        %v603 = vsel %vm468, %v595, -inf
        %604 = vmax.xlane.f32.xlu0 %v603
        %v605 = vpop.xlane.xlu0 %604
        %v606 = vsel %vm468, %v596, -inf
        %607 = vmax.xlane.f32.xlu0 %v606
        %v608 = vpop.xlane.xlu0 %607
        %v609 = vsub.f32 %v593, %v599
        %v610 = vsub.f32 %v594, %v602
        %v611 = vsub.f32 %v595, %v605
        %v612 = vsub.f32 %v596, %v608
        %v613 = vmul.f32 %v609, 1.442695
        %v614 = vpow.pop %v613
        %v615 = vmul.f32 %v610, 1.442695
        %v616 = vpow.pop %v615
        %v617 = vmul.f32 %v611, 1.442695
        %v618 = vpow.pop %v617
        %v619 = vmul.f32 %v612, 1.442695
        %v620 = vpow.pop %v619
        %v621 = vsel %vm468, %v614, 0.0
        %622 = vadd.xlane.f32.xlu0 %v621
        %v623 = vpop.xlane.xlu0 %622
        %v624 = vsel %vm468, %v616, 0.0
        %625 = vadd.xlane.f32.xlu0 %v624
        %v626 = vpop.xlane.xlu0 %625
        %v627 = vsel %vm468, %v618, 0.0
        %628 = vadd.xlane.f32.xlu0 %v627
        %v629 = vpop.xlane.xlu0 %628
        %v630 = vsel %vm468, %v620, 0.0
        %631 = vadd.xlane.f32.xlu0 %v630
        %v632 = vpop.xlane.xlu0 %631
        %v633 = vrcp.pop %v623
        %v634 = vrcp.pop %v626
        %v635 = vrcp.pop %v629
        %v636 = vrcp.pop %v632
        %v637 = vmul.f32 %v614, %v633
        %v638 = vmul.f32 %v616, %v634
        %v639 = vmul.f32 %v618, %v635
        %v640 = vmul.f32 %v620, %v636
        %v641 = vld [vmem:[#allocation7] sm:$0x1]
        %v642 = vld [vmem:[#allocation9] sm:$0x1]
        %v644 = vsel %vm468, %v482, 0
        %646 = vmatpush.msra.mxu0 0.0
        %647 = vmatpush.msra.mxu0 0.0
        %648 = vmatpush.msra.mxu0 0.0
        %649 = vmatpush.msra.mxu0 0.0
        %650 = vmatpush.msra.mxu0 0.0
        %651 = vmatpush.msra.mxu0 0.0
        %652 = vmatpush.msra.mxu0 0.0
        %653 = vmatpush.msra.mxu0 0.0
        %654 = vmatpush.msra.mxu0 0.0
        %655 = vmatpush.msra.mxu0 0.0
        %656 = vmatpush.msra.mxu0 0.0
        %657 = vmatpush.msra.mxu0 0.0
        %658 = vmatpush.msra.mxu0 %v640
        %659 = vmatpush.msra.mxu0 %v639
        %660 = vmatpush.msra.mxu0 %v638
        %661 = vmatpush.msra.mxu0 %v637
        %662 = vmatmul.f32.gmra.mxu0 %v644
        %v663 = vpop.f32.mrf.mxu0
        %v664 = vadd.f32 0.0, %v663
        %665 = vdwg.mxu0
        %v666 = vadd.f32 %v482, %v664
        %v667 = vsel %vm468, %v666, 0.0
        %v668 = vrot.slane %v667, 4
        %v669 = vadd.f32 %v667, %v668
        %v670 = vrot.slane %v669, 2
        %v671 = vadd.f32 %v669, %v670
        %v672 = vrot.slane %v671, 1
        %v673 = vadd.f32 %v671, %v672
        %v674 = vmul.f32 %v666, %v666
        %v675 = vsel %vm468, %v674, 0.0
        %v676 = vrot.slane %v675, 4
        %v677 = vadd.f32 %v675, %v676
        %v678 = vrot.slane %v677, 2
        %v679 = vadd.f32 %v677, %v678
        %v680 = vrot.slane %v679, 1
        %v681 = vadd.f32 %v679, %v680
        %v682 = vmul.f32 %v673, 0.125
        %v683 = vmul.f32 %v681, 0.125
        %v684 = vmul.f32 %v682, %v682
        %v685 = vsub.f32 %v683, %v684
        %v686 = vmax.f32 %v685, 0.0
        %v687 = vadd.f32 %v686, 1e-05
        %v688 = vrsqrt.pop %v687
        %v689 = vmul.f32 %v688, %v687
        %v690 = vmul.f32 %v689, %v688
        %v691 = vmul.f32 0.5, %v690
        %v692 = vsub.f32 1.5, %v691
        %v693 = vmul.f32 %v688, %v692
        %vm694 = vweird.f32 %v687
        %vm695 = vweird.f32 %v688
        %vm696 = vmor %vm694, %vm695
        %v697 = vsel %vm696, %v688, %v693
        %v698 = vmul.f32 %v641, %v697
        %v699 = vmul.f32 %v682, %v698
        %v700 = vsub.f32 %v642, %v699
        %v702 = vperm.slane %v698, 0
        %v704 = vmul.f32 %v666, %v702
        %v706 = vperm.slane %v700, 0
        %v708 = vadd.f32 %v704, %v706
        %v709 = vld [vmem:[%s3] sm:$0xff]
        %v710 = vld [vmem:[%s3 + $0x8] sm:$0xff]
        %v711 = vld [vmem:[%s3 + $0x10] sm:$0xff]
        %v712 = vld [vmem:[%s3 + $0x18] sm:$0xff]
        %v713 = vld [vmem:[%s4] sm:$0x1]
        %v715 = vperm.slane %v713, 0
        %v718 = vsel %vm468, %v708, 0
        %720 = vmatpush.msra.mxu0 0.0
        %721 = vmatpush.msra.mxu0 0.0
        %722 = vmatpush.msra.mxu0 0.0
        %723 = vmatpush.msra.mxu0 0.0
        %724 = vmatpush.msra.mxu0 0.0
        %725 = vmatpush.msra.mxu0 0.0
        %726 = vmatpush.msra.mxu0 0.0
        %727 = vmatpush.msra.mxu0 0.0
        %728 = vmatpush.msra.mxu0 0.0
        %729 = vmatpush.msra.mxu0 0.0
        %730 = vmatpush.msra.mxu0 0.0
        %731 = vmatpush.msra.mxu0 0.0
        %732 = vmatpush.msra.mxu0 %v712
        %733 = vmatpush.msra.mxu0 %v711
        %734 = vmatpush.msra.mxu0 %v710
        %735 = vmatpush.msra.mxu0 %v709
        %736 = vmatmul.f32.gmra.mxu0 %v718
        %v737 = vpop.f32.mrf.mxu0
        %v738 = vadd.f32 %v715, %v737
        %739 = vdwg.mxu0
        %v740 = vadd.f32 %v708, %v738
        %v741 = vsel %vm468, %v740, 0.0
        %v742 = vrot.slane %v741, 4
        %v743 = vadd.f32 %v741, %v742
        %v744 = vrot.slane %v743, 2
        %v745 = vadd.f32 %v743, %v744
        %v746 = vrot.slane %v745, 1
        %v747 = vadd.f32 %v745, %v746
        %v748 = vmul.f32 %v740, %v740
        %v749 = vsel %vm468, %v748, 0.0
        %v750 = vrot.slane %v749, 4
        %v751 = vadd.f32 %v749, %v750
        %v752 = vrot.slane %v751, 2
        %v753 = vadd.f32 %v751, %v752
        %v754 = vrot.slane %v753, 1
        %v755 = vadd.f32 %v753, %v754
        %v756 = vmul.f32 %v747, 0.125
        %v757 = vmul.f32 %v755, 0.125
        %v758 = vmul.f32 %v756, %v756
        %v759 = vsub.f32 %v757, %v758
        %v760 = vmax.f32 %v759, 0.0
        %v761 = vadd.f32 %v760, 1e-05
        %v762 = vrsqrt.pop %v761
        %v763 = vmul.f32 %v762, %v761
        %v764 = vmul.f32 %v763, %v762
        %v765 = vmul.f32 0.5, %v764
        %v766 = vsub.f32 1.5, %v765
        %v767 = vmul.f32 %v762, %v766
        %vm768 = vweird.f32 %v761
        %vm769 = vweird.f32 %v762
        %vm770 = vmor %vm768, %vm769
        %v771 = vsel %vm770, %v762, %v767
        %v772 = vmul.f32 %v641, %v771
        %v773 = vmul.f32 %v756, %v772
        %v774 = vsub.f32 %v642, %v773
        %v776 = vperm.slane %v772, 0
        %v778 = vmul.f32 %v740, %v776
        %v780 = vperm.slane %v774, 0
        %v782 = vadd.f32 %v778, %v780
        %v783 = vld [vmem:[%s7] sm:$0xff]
        %v784 = vld [vmem:[%s7 + $0x8] sm:$0xff]
        %v785 = vld [vmem:[%s7 + $0x10] sm:$0xff]
        %v786 = vld [vmem:[%s7 + $0x18] sm:$0xff]
        %v787 = vld [vmem:[#allocation2] sm:$0x1]
        %v789 = vperm.slane %v787, 0
        %v792 = vsel %vm468, %v782, 0
        %794 = vmatpush.msra.mxu0 0.0
        %795 = vmatpush.msra.mxu0 0.0
        %796 = vmatpush.msra.mxu0 0.0
        %797 = vmatpush.msra.mxu0 0.0
        %798 = vmatpush.msra.mxu0 0.0
        %799 = vmatpush.msra.mxu0 0.0
        %800 = vmatpush.msra.mxu0 0.0
        %801 = vmatpush.msra.mxu0 0.0
        %802 = vmatpush.msra.mxu0 0.0
        %803 = vmatpush.msra.mxu0 0.0
        %804 = vmatpush.msra.mxu0 0.0
        %805 = vmatpush.msra.mxu0 0.0
        %806 = vmatpush.msra.mxu0 %v786
        %807 = vmatpush.msra.mxu0 %v785
        %808 = vmatpush.msra.mxu0 %v784
        %809 = vmatpush.msra.mxu0 %v783
        %810 = vmatmul.f32.gmra.mxu0 %v792
        %v811 = vpop.f32.mrf.mxu0
        %v812 = vadd.f32 %v789, %v811
        %813 = vdwg.mxu0
        %vm814 = vcmp.ge.f32.partialorder %v812, 0.0
        %v815 = vld [vmem:[#allocation3] sm:$0x1]
        %v817 = vperm.slane %v815, 0
        %v819 = vmul.f32 %v817, %v812
        %v820 = vsel %vm814, %v812, %v819
        %v821 = vld [vmem:[%s10] sm:$0xff]
        %v822 = vld [vmem:[%s11] sm:$0x1]
        %823 = vxpose.xlu0.b32.start [1/16] %v820, 128
        %824 = vxpose.xlu0.b32.cont [2/16] 0.0, 128
        %825 = vxpose.xlu0.b32.cont [3/16] 0.0, 128
        %826 = vxpose.xlu0.b32.cont [4/16] 0.0, 128
        %827 = vxpose.xlu0.b32.cont [5/16] 0.0, 128
        %828 = vxpose.xlu0.b32.cont [6/16] 0.0, 128
        %829 = vxpose.xlu0.b32.cont [7/16] 0.0, 128
        %830 = vxpose.xlu0.b32.cont [8/16] 0.0, 128
        %831 = vxpose.xlu0.b32.cont [9/16] 0.0, 128
        %832 = vxpose.xlu0.b32.cont [10/16] 0.0, 128
        %833 = vxpose.xlu0.b32.cont [11/16] 0.0, 128
        %834 = vxpose.xlu0.b32.cont [12/16] 0.0, 128
        %835 = vxpose.xlu0.b32.cont [13/16] 0.0, 128
        %836 = vxpose.xlu0.b32.cont [14/16] 0.0, 128
        %837 = vxpose.xlu0.b32.cont [15/16] 0.0, 128
        %838 = vxpose.xlu0.b32.end [16/16] 0.0, 128
        %v839 = vpop.trf.xlu0
        %v840 = vpop.trf.xlu0
        %v841 = vpop.trf.xlu0
        %v842 = vpop.trf.xlu0
        %v843 = vpop.trf.xlu0
        %v844 = vpop.trf.xlu0
        %v845 = vpop.trf.xlu0
        %v846 = vpop.trf.xlu0
        %v847 = vpop.trf.xlu0
        %v848 = vpop.trf.xlu0
        %v849 = vpop.trf.xlu0
        %v850 = vpop.trf.xlu0
        %v851 = vpop.trf.xlu0
        %v852 = vpop.trf.xlu0
        %v853 = vpop.trf.xlu0
        %v854 = vpop.trf.xlu0
        %v856 = vsel %vm490, %v839, 0
        %858 = vmatpush.msra.mxu0 0.0
        %859 = vmatpush.msra.mxu0 0.0
        %860 = vmatpush.msra.mxu0 0.0
        %861 = vmatpush.msra.mxu0 0.0
        %862 = vmatpush.msra.mxu0 0.0
        %863 = vmatpush.msra.mxu0 0.0
        %864 = vmatpush.msra.mxu0 0.0
        %865 = vmatpush.msra.mxu0 0.0
        %866 = vmatpush.msra.mxu0 0.0
        %867 = vmatpush.msra.mxu0 0.0
        %868 = vmatpush.msra.mxu0 0.0
        %869 = vmatpush.msra.mxu0 0.0
        %870 = vmatpush.msra.mxu0 0.0
        %871 = vmatpush.msra.mxu0 0.0
        %872 = vmatpush.msra.mxu0 0.0
        %873 = vmatpush.msra.mxu0 %v821
        %874 = vmatmul.f32.gmra.mxu0 %v856
        %v875 = vpop.f32.mrf.mxu0
        %v876 = vadd.f32 %v822, %v875
        %877 = vdwg.mxu0
        %v878 = vadd.f32 %v876, %v481
        %vm879 = vcmask 57344
        %880 = vst.msk [vmem:[%s462] sm:$0x1] %vm879, %v878
        %s881 = sand.u32 %s299, 1
        %s882 = scalar_lea.sflag [#allocation6], %s881
        %s883 = sand.u32 %s299, 1
        %s884 = scalar_lea.vmem [#allocation10], %s883
        // Predicated region
        $region81: #{tpu_custom_call.1} parent=67 // pred_check
          %p885 = pneg %p309
        $region82: #{tpu_custom_call.1} parent=67 // pred_check_branch
          %887 = sbr.rel (%p885) target = $region84
        $region83: #{tpu_custom_call.1} parent=67 // pred_region
          %889 = vsyncadd %s882, 0
          %s890 = scalar_lea.hbm %s12, %s34
          %s892 = sshll.u32 %s884, 4
          %s893 = int_to_ptr.vmem [resolvable:$true] %s892
          %s894 = sshll.u32 %s890, 4
          %s895 = int_to_ptr.hbm [resolvable:$true] %s894
          %897 = dma.vmem_to_hbm [thread:$0]  %s893, 16, %s895, %s882
        $region84: #{tpu_custom_call.1} parent=67 // pred_fallthru
          _
      $region68: #{tpu_custom_call.1} parent=5 // pred_fallthru
        _
      %p898 = scmp.le.s32.totalorder 2, %s29
      // Predicated region
      $region85: #{tpu_custom_call.1} parent=5 // pred_check
        %p899 = pneg %p898
      $region86: #{tpu_custom_call.1} parent=5 // pred_check_branch
        %901 = sbr.rel (%p899) target = $region88
      $region87: #{tpu_custom_call.1} parent=5 // pred_region
        %s902 = ssub.s32 %s29, 2
        // Predicated region
        $region89: #{tpu_custom_call.1} parent=87 // pred_check
          %p903 = pneg %p315
        $region90: #{tpu_custom_call.1} parent=87 // pred_check_branch
          %905 = sbr.rel (%p903) target = $region92
        $region91: #{tpu_custom_call.1} parent=87 // pred_region
          %s906 = sand.u32 %s300, 1
          %s907 = scalar_lea.sflag [#allocation6], %s906
          %s908 = sand.u32 %s300, 1
          %s909 = scalar_lea.vmem [#allocation10], %s908
          %911 = dma.done %s907, 16
        $region92: #{tpu_custom_call.1} parent=87 // pred_fallthru
          _
      $region88: #{tpu_custom_call.1} parent=5 // pred_fallthru
        _
    $region6: #{tpu_custom_call.1} parent=1 // loop_footer
      %s33 = sadd.s32 1, %s29
    $region7: #{tpu_custom_call.1} parent=1 // loop_footer_branch
      %28 = sbr.rel target = $region3
    $region8: #{tpu_custom_call.1} parent=1 // loop_exit
      _
    %912 = vsyncpa [#allocation5], 1
    %s913 = scalar_lea.sflag [#allocation5], 1
    %914 = vsyncpa %s913, 1
    %915 = vsyncpa [#allocation8], 1
    %916 = vsyncpa [#allocation6], 1
    %s917 = scalar_lea.sflag [#allocation6], 1
    %918 = vsyncpa %s917, 1

</llo_original>
